<compile_context>
chip_gen: v7x
topology: tpu7x:2x2x1
jax: 0.10.0
libtpu: 0.0.40
codegen_flags: <defaults>
</compile_context>

<pallas_src>
import functools

import jax
import jax.numpy as jnp
from jax.experimental import pallas as pl
from jax.experimental.pallas import tpu as pltpu

# ----------------------------- config ---------------------------------------
OBS_DIM = 16          # prod(env.single_observation_space.shape)
ACT_DIM = 4           # prod(env.single_action_space.shape)
HIDDEN_DIM = 32
HIDDEN_LAYERS = 2     # `layers` argument of gen_reward_net
ENSEMBLE = 3
BATCH = 8
LEAKY_SLOPE = 0.01    # nn.LeakyReLU default


def _leaky_relu(x):
    return jnp.where(x > 0, x, LEAKY_SLOPE * x)


# ----------------------------- kernel ---------------------------------------
def reward_net_kernel(x_ref, a_ref, w0x_ref, w0a_ref, b0_ref,
                      wh_ref, bh_ref, wo_ref, bo_ref, out_ref,
                      *, num_hidden_layers):
    """Single invocation (no grid). The 3 ensemble members live in disjoint
    lane blocks of width HIDDEN_DIM; hidden weights are block-diagonal so the
    members never mix. The output weights carry the 1/ENSEMBLE factor, so the
    ensemble mean is the lane-sum of the 3 member outputs."""
    # First linear: packed weight split into obs / act partitions (no concat).
    h = (jnp.dot(x_ref[...], w0x_ref[...], preferred_element_type=jnp.float32)
         + jnp.dot(a_ref[...], w0a_ref[...], preferred_element_type=jnp.float32)
         + b0_ref[...])
    h = _leaky_relu(h)

    # Hidden stack: Linear -> LeakyReLU -> Dropout(identity in eval mode).
    for l in range(num_hidden_layers):
        h = jnp.dot(h, wh_ref[l], preferred_element_type=jnp.float32) + bh_ref[l]
        h = _leaky_relu(h)

    # Output layer: block-diagonal (3H, 3), already scaled by 1/ENSEMBLE.
    y = jnp.dot(h, wo_ref[...], preferred_element_type=jnp.float32) + bo_ref[...]
    out_ref[...] = jnp.sum(y, axis=-1, keepdims=True)   # single write, (B, 1)


# ----------------------------- wrapper ---------------------------------------
def reward_net_forward(x, a, packed_params):
    """x: (B, OBS_DIM), a: (B, ACT_DIM) -> (B, 1) mean ensemble reward."""
    w0x, w0a, b0_p, wh_bd, bh_p, wo_bd, bo_p = packed_params
    b = x.shape[0]

    kernel = functools.partial(reward_net_kernel,
                               num_hidden_layers=HIDDEN_LAYERS)
    vmem = pl.BlockSpec(memory_space=pltpu.MemorySpace.VMEM)

    # TODO(synk): if batch grows large, tile the batch axis with a 'parallel'
    # grid dimension (v7x megacore); at B=8 a single grid-free call is optimal.
    out = pl.pallas_call(
        kernel,
        out_shape=jax.ShapeDtypeStruct((b, 1), jnp.float32),
        in_specs=[vmem] * 9,
        out_specs=vmem,
    )(x, a, w0x, w0a, b0_p, wh_bd, bh_p, wo_bd, bo_p)
    return out


# ----------------------------- params ----------------------------------------
def init_params(key):
    """Deterministic synthetic parameters matching the nn.Linear shapes
    (stored transposed: (in, out)) stacked over the 3 ensemble members."""
    d_in = OBS_DIM + ACT_DIM
    ks = jax.random.split(key, 6)
    scale = 0.1
    w0 = scale * jax.random.normal(ks[0], (ENSEMBLE, d_in, HIDDEN_DIM), jnp.float32)
    b0 = scale * jax.random.normal(ks[1], (ENSEMBLE, 1, HIDDEN_DIM), jnp.float32)
    wh = scale * jax.random.normal(
        ks[2], (ENSEMBLE, HIDDEN_LAYERS, HIDDEN_DIM, HIDDEN_DIM), jnp.float32)
    bh = scale * jax.random.normal(
        ks[3], (ENSEMBLE, HIDDEN_LAYERS, 1, HIDDEN_DIM), jnp.float32)
    wo = scale * jax.random.normal(ks[4], (ENSEMBLE, HIDDEN_DIM, 1), jnp.float32)
    bo = scale * jax.random.normal(ks[5], (ENSEMBLE, 1, 1), jnp.float32)
    return (w0, b0, wh, bh, wo, bo)


def pack_params(params):
    """One-time lane-fusion of the 3 ensemble members (done outside the kernel):
      - first layer packed to (d_in, 3H), split into obs/act parts,
      - hidden layers as block-diagonal (3H, 3H),
      - output layer as block-diagonal (3H, 3) with 1/ENSEMBLE folded in."""
    w0, b0, wh, bh, wo, bo = params
    E, d_in, H = w0.shape
    L = wh.shape[1]
    EH = E * H

    w0_packed = jnp.transpose(w0, (1, 0, 2)).reshape(d_in, EH)   # (d_in, 3H)
    w0x = w0_packed[:OBS_DIM]                                    # (OBS_DIM, 3H)
    w0a = w0_packed[OBS_DIM:]                                    # (ACT_DIM, 3H)
    b0_p = jnp.transpose(b0, (1, 0, 2)).reshape(1, EH)           # (1, 3H)

    wh_bd = jnp.zeros((L, EH, EH), jnp.float32)                  # block-diag
    for l in range(L):
        for m in range(E):
            wh_bd = wh_bd.at[l, m * H:(m + 1) * H, m * H:(m + 1) * H].set(wh[m, l])
    bh_p = jnp.transpose(bh, (1, 2, 0, 3)).reshape(L, 1, EH)     # (L, 1, 3H)

    wo_bd = jnp.zeros((EH, E), jnp.float32)                      # (3H, 3)
    for m in range(E):
        wo_bd = wo_bd.at[m * H:(m + 1) * H, m].set(wo[m, :, 0] / E)
    bo_p = (bo[:, 0, 0] / E).reshape(1, E)                       # (1, 3)

    return (w0x, w0a, b0_p, wh_bd, bh_p, wo_bd, bo_p)


def reference_forward(x, a, params):
    """Pure-JAX reference of RewardNet.forward (eval mode), per-member."""
    w0, b0, wh, bh, wo, bo = params
    xa = jnp.concatenate([x, a], axis=1)
    ys = []
    for m in range(ENSEMBLE):
        h = _leaky_relu(xa @ w0[m] + b0[m])
        for l in range(HIDDEN_LAYERS):
            h = _leaky_relu(h @ wh[m, l] + bh[m, l])
        ys.append(h @ wo[m] + bo[m])
    return jnp.mean(jnp.stack(ys, axis=0), axis=0)


# ----------------------------- main -------------------------------------------
if __name__ == "__main__":
    key = jax.random.PRNGKey(0)
    kx, ka, kp = jax.random.split(key, 3)

    x = jax.random.normal(kx, (BATCH, OBS_DIM), jnp.float32)
    a = jax.random.normal(ka, (BATCH, ACT_DIM), jnp.float32)
    raw_params = init_params(kp)
    packed_params = pack_params(raw_params)   # one-time fusion/prep

    out = reward_net_forward(x, a, packed_params)
    out = jax.block_until_ready(out)

    ref = reference_forward(x, a, raw_params)
    assert out.shape == (BATCH, 1), out.shape
    assert jnp.allclose(out, ref, atol=1e-5, rtol=1e-4), (out, ref)

    print("KERNEL_OK")
</pallas_src>

<mosaic_0001>
module attributes {stable_mosaic.version = 11 : i64} {
  func.func @reward_net_kernel(%arg0: memref<8x16xf32, #tpu.memory_space<vmem>>, %arg1: memref<8x4xf32, #tpu.memory_space<vmem>>, %arg2: memref<16x96xf32, #tpu.memory_space<vmem>>, %arg3: memref<4x96xf32, #tpu.memory_space<vmem>>, %arg4: memref<1x96xf32, #tpu.memory_space<vmem>>, %arg5: memref<2x96x96xf32, #tpu.memory_space<vmem>>, %arg6: memref<2x1x96xf32, #tpu.memory_space<vmem>>, %arg7: memref<96x3xf32, #tpu.memory_space<vmem>>, %arg8: memref<1x3xf32, #tpu.memory_space<vmem>>, %arg9: memref<8x1xf32, #tpu.memory_space<vmem>>) attributes {dimension_semantics = [], scalar_prefetch = 0 : i64, scratch_operands = 0 : i64, tpu.core_type = #tpu.core_type<tc>} {
    %c0 = arith.constant 0 : index
    %c0_0 = arith.constant 0 : index
    %0 = vector.load %arg0[%c0, %c0_0] : memref<8x16xf32, #tpu.memory_space<vmem>>, vector<8x16xf32>
    %c0_1 = arith.constant 0 : index
    %c0_2 = arith.constant 0 : index
    %1 = vector.load %arg2[%c0_1, %c0_2] : memref<16x96xf32, #tpu.memory_space<vmem>>, vector<16x96xf32>
    %cst = arith.constant dense<0.000000e+00> : vector<8x96xf32>
    %2 = tpu.matmul %0, %1, %cst {dimension_numbers = #tpu.dot_dimension_numbers<[1], [0], [0], [1], [0, 0, 1, 1], [], []>} : vector<8x16xf32>, vector<16x96xf32>, vector<8x96xf32> -> vector<8x96xf32>
    %c0_3 = arith.constant 0 : index
    %c0_4 = arith.constant 0 : index
    %3 = vector.load %arg1[%c0_3, %c0_4] : memref<8x4xf32, #tpu.memory_space<vmem>>, vector<8x4xf32>
    %c0_5 = arith.constant 0 : index
    %c0_6 = arith.constant 0 : index
    %4 = vector.load %arg3[%c0_5, %c0_6] : memref<4x96xf32, #tpu.memory_space<vmem>>, vector<4x96xf32>
    %cst_7 = arith.constant dense<0.000000e+00> : vector<8x96xf32>
    %5 = tpu.matmul %3, %4, %cst_7 {dimension_numbers = #tpu.dot_dimension_numbers<[1], [0], [0], [1], [0, 0, 1, 1], [], []>} : vector<8x4xf32>, vector<4x96xf32>, vector<8x96xf32> -> vector<8x96xf32>
    %6 = arith.addf %2, %5 : vector<8x96xf32>
    %c0_8 = arith.constant 0 : index
    %c0_9 = arith.constant 0 : index
    %7 = vector.load %arg4[%c0_8, %c0_9] : memref<1x96xf32, #tpu.memory_space<vmem>>, vector<1x96xf32>
    %8 = vector.broadcast %7 : vector<1x96xf32> to vector<8x96xf32>
    %9 = arith.addf %6, %8 : vector<8x96xf32>
    %cst_10 = arith.constant 0.000000e+00 : f32
    %10 = vector.broadcast %cst_10 : f32 to vector<8x96xf32>
    %11 = arith.cmpf ogt, %9, %10 : vector<8x96xf32>
    %cst_11 = arith.constant 0.00999999977 : f32
    %12 = vector.broadcast %cst_11 : f32 to vector<8x96xf32>
    %13 = arith.mulf %12, %9 : vector<8x96xf32>
    %14 = arith.select %11, %9, %13 : vector<8x96xi1>, vector<8x96xf32>
    %c0_12 = arith.constant 0 : index
    %c0_13 = arith.constant 0 : index
    %c0_14 = arith.constant 0 : index
    %15 = vector.load %arg5[%c0_12, %c0_13, %c0_14] : memref<2x96x96xf32, #tpu.memory_space<vmem>>, vector<1x96x96xf32>
    %16 = vector.shape_cast %15 : vector<1x96x96xf32> to vector<96x96xf32>
    %cst_15 = arith.constant dense<0.000000e+00> : vector<8x96xf32>
    %17 = tpu.matmul %14, %16, %cst_15 {dimension_numbers = #tpu.dot_dimension_numbers<[1], [0], [0], [1], [0, 0, 1, 1], [], []>} : vector<8x96xf32>, vector<96x96xf32>, vector<8x96xf32> -> vector<8x96xf32>
    %c0_16 = arith.constant 0 : index
    %c0_17 = arith.constant 0 : index
    %c0_18 = arith.constant 0 : index
    %18 = vector.load %arg6[%c0_16, %c0_17, %c0_18] : memref<2x1x96xf32, #tpu.memory_space<vmem>>, vector<1x1x96xf32>
    %19 = vector.shape_cast %18 : vector<1x1x96xf32> to vector<1x96xf32>
    %20 = vector.broadcast %19 : vector<1x96xf32> to vector<8x96xf32>
    %21 = arith.addf %17, %20 : vector<8x96xf32>
    %cst_19 = arith.constant 0.000000e+00 : f32
    %22 = vector.broadcast %cst_19 : f32 to vector<8x96xf32>
    %23 = arith.cmpf ogt, %21, %22 : vector<8x96xf32>
    %cst_20 = arith.constant 0.00999999977 : f32
    %24 = vector.broadcast %cst_20 : f32 to vector<8x96xf32>
    %25 = arith.mulf %24, %21 : vector<8x96xf32>
    %26 = arith.select %23, %21, %25 : vector<8x96xi1>, vector<8x96xf32>
    %c1 = arith.constant 1 : index
    %c0_21 = arith.constant 0 : index
    %c0_22 = arith.constant 0 : index
    %27 = vector.load %arg5[%c1, %c0_21, %c0_22] : memref<2x96x96xf32, #tpu.memory_space<vmem>>, vector<1x96x96xf32>
    %28 = vector.shape_cast %27 : vector<1x96x96xf32> to vector<96x96xf32>
    %cst_23 = arith.constant dense<0.000000e+00> : vector<8x96xf32>
    %29 = tpu.matmul %26, %28, %cst_23 {dimension_numbers = #tpu.dot_dimension_numbers<[1], [0], [0], [1], [0, 0, 1, 1], [], []>} : vector<8x96xf32>, vector<96x96xf32>, vector<8x96xf32> -> vector<8x96xf32>
    %c1_24 = arith.constant 1 : index
    %c0_25 = arith.constant 0 : index
    %c0_26 = arith.constant 0 : index
    %30 = vector.load %arg6[%c1_24, %c0_25, %c0_26] : memref<2x1x96xf32, #tpu.memory_space<vmem>>, vector<1x1x96xf32>
    %31 = vector.shape_cast %30 : vector<1x1x96xf32> to vector<1x96xf32>
    %32 = vector.broadcast %31 : vector<1x96xf32> to vector<8x96xf32>
    %33 = arith.addf %29, %32 : vector<8x96xf32>
    %cst_27 = arith.constant 0.000000e+00 : f32
    %34 = vector.broadcast %cst_27 : f32 to vector<8x96xf32>
    %35 = arith.cmpf ogt, %33, %34 : vector<8x96xf32>
    %cst_28 = arith.constant 0.00999999977 : f32
    %36 = vector.broadcast %cst_28 : f32 to vector<8x96xf32>
    %37 = arith.mulf %36, %33 : vector<8x96xf32>
    %38 = arith.select %35, %33, %37 : vector<8x96xi1>, vector<8x96xf32>
    %c0_29 = arith.constant 0 : index
    %c0_30 = arith.constant 0 : index
    %39 = vector.load %arg7[%c0_29, %c0_30] : memref<96x3xf32, #tpu.memory_space<vmem>>, vector<96x3xf32>
    %cst_31 = arith.constant dense<0.000000e+00> : vector<8x3xf32>
    %40 = tpu.matmul %38, %39, %cst_31 {dimension_numbers = #tpu.dot_dimension_numbers<[1], [0], [0], [1], [0, 0, 1, 1], [], []>} : vector<8x96xf32>, vector<96x3xf32>, vector<8x3xf32> -> vector<8x3xf32>
    %c0_32 = arith.constant 0 : index
    %c0_33 = arith.constant 0 : index
    %41 = vector.load %arg8[%c0_32, %c0_33] : memref<1x3xf32, #tpu.memory_space<vmem>>, vector<1x3xf32>
    %42 = vector.broadcast %41 : vector<1x3xf32> to vector<8x3xf32>
    %43 = arith.addf %40, %42 : vector<8x3xf32>
    %cst_34 = arith.constant dense<0.000000e+00> : vector<8xf32>
    %44 = vector.multi_reduction <add>, %43, %cst_34 [1] : vector<8x3xf32> to vector<8xf32>
    %45 = vector.shape_cast %44 : vector<8xf32> to vector<8x1xf32>
    %c0_35 = arith.constant 0 : index
    %c0_36 = arith.constant 0 : index
    %46 = vector.load %arg9[%c0_35, %c0_36] : memref<8x1xf32, #tpu.memory_space<vmem>>, vector<8x1xf32>
    tpu.vector_store %arg9[%c0_35, %c0_36], %45 {strides = array<i32>} : memref<8x1xf32, #tpu.memory_space<vmem>>, vector<8x1xf32>,
    return
  }
}

</mosaic_0001>

<llo_original>
// kernel: tpu_custom_call.1
$region0: #{tpu_custom_call.1}
  #allocation0 [shape = 'u32[]', space=smem, size = 0x4, offset = 0x4, fixed_abs, tag = 'smem constant byte address 0x4 - core index']
  #allocation1 [shape = 'u32[144,128]{1,0:T(1,128)}', space=vmem, size = 0x12000, scoped, tag = 'internal scratch']
  %s0 = inlined_call_operand.vmem [shape: f32[8,16], index: 0, kind: input, shape index: {}]
  %s1 = inlined_call_operand.vmem [shape: f32[8,4], index: 1, kind: input, shape index: {}]
  %s2 = inlined_call_operand.vmem [shape: f32[16,96], index: 2, kind: input, shape index: {}]
  %s3 = inlined_call_operand.vmem [shape: f32[4,96], index: 3, kind: input, shape index: {}]
  %s4 = inlined_call_operand.vmem [shape: f32[1,96], index: 4, kind: input, shape index: {}]
  %s5 = inlined_call_operand.hbm [shape: f32[2,96,96], index: 5, kind: input, shape index: {}]
  %s6 = inlined_call_operand.vmem [shape: f32[2,1,96], index: 6, kind: input, shape index: {}]
  %s7 = inlined_call_operand.vmem [shape: f32[96,3], index: 7, kind: input, shape index: {}]
  %s8 = inlined_call_operand.vmem [shape: f32[1,3], index: 8, kind: input, shape index: {}]
  %s9 = inlined_call_operand.vmem [shape: f32[8,1], index: 9, kind: output, shape index: {}]
  %s10 = sld [smem:[#allocation0]]
  $region50: #{tpu_custom_call.1} parent=0
    _
  %s12 = ssub.s32 1, %s10
  %s13 = scalar_select 0, %s12, %s10
  $region1: #{tpu_custom_call.1} parent=0
    #allocation2 [shape = 'u8[98304]{0}', space=vmem, size = 0x18000, scoped, tag = 'input window, operand 5, single buffered']
    #allocation3 [shape = 's32[1]{0}', space=sflag, size = 0x4, scoped, tag = 'scoped memory for tpu_custom_call.1']
    %14 = vsyncpa [#allocation3], 0
    // Predicated region
    $region2: #{tpu_custom_call.1} parent=1 // pred_check
      _
    $region3: #{tpu_custom_call.1} parent=1 // pred_check_branch
      %16 = sbr.rel (0) target = $region5
    $region4: #{tpu_custom_call.1} parent=1 // pred_region
      _
    $region5: #{tpu_custom_call.1} parent=1 // pred_fallthru
      _
    // Predicated region
    $region6: #{tpu_custom_call.1} parent=1 // pred_check
      _
    $region7: #{tpu_custom_call.1} parent=1 // pred_check_branch
      %18 = sbr.rel (0) target = $region9
    $region8: #{tpu_custom_call.1} parent=1 // pred_region
      _
    $region9: #{tpu_custom_call.1} parent=1 // pred_fallthru
      _
    // Predicated region
    $region10: #{tpu_custom_call.1} parent=1 // pred_check
      _
    $region11: #{tpu_custom_call.1} parent=1 // pred_check_branch
      %20 = sbr.rel (0) target = $region13
    $region12: #{tpu_custom_call.1} parent=1 // pred_region
      _
    $region13: #{tpu_custom_call.1} parent=1 // pred_fallthru
      _
    // Predicated region
    $region14: #{tpu_custom_call.1} parent=1 // pred_check
      _
    $region15: #{tpu_custom_call.1} parent=1 // pred_check_branch
      %22 = sbr.rel (0) target = $region17
    $region16: #{tpu_custom_call.1} parent=1 // pred_region
      _
    $region17: #{tpu_custom_call.1} parent=1 // pred_fallthru
      _
    // Predicated region
    $region18: #{tpu_custom_call.1} parent=1 // pred_check
      _
    $region19: #{tpu_custom_call.1} parent=1 // pred_check_branch
      %24 = sbr.rel (0) target = $region21
    $region20: #{tpu_custom_call.1} parent=1 // pred_region
      _
    $region21: #{tpu_custom_call.1} parent=1 // pred_fallthru
      _
    // Predicated region
    $region22: #{tpu_custom_call.1} parent=1 // pred_check
      _
    $region23: #{tpu_custom_call.1} parent=1 // pred_check_branch
      %26 = sbr.rel (0) target = $region25
    $region24: #{tpu_custom_call.1} parent=1 // pred_region
      %s28 = ssub.s32 3072, 3072
      %29 = vsyncadd [#allocation3], %s28
      %s30 = sshll.u32 [#allocation2], 4
      %s31 = int_to_ptr.vmem [resolvable:$true] %s30
      %36 = dma.hbm_to_vmem [thread:$0]  %s5, 3072, %s31, [#allocation3], 128, 128, 8
    $region25: #{tpu_custom_call.1} parent=1 // pred_fallthru
      _
    // Predicated region
    $region26: #{tpu_custom_call.1} parent=1 // pred_check
      _
    $region27: #{tpu_custom_call.1} parent=1 // pred_check_branch
      %38 = sbr.rel (0) target = $region29
    $region28: #{tpu_custom_call.1} parent=1 // pred_region
      _
    $region29: #{tpu_custom_call.1} parent=1 // pred_fallthru
      _
    // Predicated region
    $region30: #{tpu_custom_call.1} parent=1 // pred_check
      _
    $region31: #{tpu_custom_call.1} parent=1 // pred_check_branch
      %40 = sbr.rel (0) target = $region33
    $region32: #{tpu_custom_call.1} parent=1 // pred_region
      _
    $region33: #{tpu_custom_call.1} parent=1 // pred_fallthru
      _
    // Predicated region
    $region34: #{tpu_custom_call.1} parent=1 // pred_check
      _
    $region35: #{tpu_custom_call.1} parent=1 // pred_check_branch
      %42 = sbr.rel (0) target = $region37
    $region36: #{tpu_custom_call.1} parent=1 // pred_region
      _
    $region37: #{tpu_custom_call.1} parent=1 // pred_fallthru
      _
    // Predicated region
    $region38: #{tpu_custom_call.1} parent=1 // pred_check
      _
    $region39: #{tpu_custom_call.1} parent=1 // pred_check_branch
      %44 = sbr.rel (0) target = $region41
    $region40: #{tpu_custom_call.1} parent=1 // pred_region
      %45 = dma.done [#allocation3], 3072
    $region41: #{tpu_custom_call.1} parent=1 // pred_fallthru
      _
    %v46 = vld [vmem:[%s0] sm:$0xff]
    %v47 = vld [vmem:[%s2] sm:$0xff]
    %v48 = vld [vmem:[%s2 + $0x8] sm:$0xff]
    %v49 = vld [vmem:[%s1] sm:$0xff]
    %v50 = vld [vmem:[%s3] sm:$0xf]
    %vm51 = vcmask 31744
    %v53 = vsel %vm51, %v49, 0
    %vm55 = vcmask 1043456
    %v57 = vsel %vm55, %v50, 0
    %59 = vmatprep.subr.mxu0 0.0
    %60 = vmatpush1.msra.mxu0 %v57
    %61 = vmatprep.subr.mxu0 0.0
    %62 = vmatpush1.msra.mxu0 0.0
    %63 = vmatprep.subr.mxu0 0.0
    %64 = vmatpush1.msra.mxu0 0.0
    %65 = vmatprep.subr.mxu0 0.0
    %66 = vmatpush1.msra.mxu0 0.0
    %67 = vmatprep.subr.mxu0 0.0
    %68 = vmatpush1.msra.mxu0 0.0
    %69 = vmatprep.subr.mxu0 0.0
    %70 = vmatpush1.msra.mxu0 0.0
    %71 = vmatprep.subr.mxu0 0.0
    %72 = vmatpush1.msra.mxu0 0.0
    %73 = vmatprep.subr.mxu0 0.0
    %74 = vmatpush1.msra.mxu0 0.0
    %75 = vmatprep.subr.mxu0 0.0
    %76 = vmatpush1.msra.mxu0 0.0
    %77 = vmatprep.subr.mxu0 0.0
    %78 = vmatpush1.msra.mxu0 0.0
    %79 = vmatprep.subr.mxu0 0.0
    %80 = vmatpush1.msra.mxu0 0.0
    %81 = vmatprep.subr.mxu0 0.0
    %82 = vmatpush1.msra.mxu0 0.0
    %83 = vmatprep.subr.mxu0 0.0
    %84 = vmatpush1.msra.mxu0 0.0
    %85 = vmatprep.subr.mxu0 0.0
    %86 = vmatpush1.msra.mxu0 0.0
    %87 = vmatprep.subr.mxu0 0.0
    %88 = vmatpush1.msra.mxu0 0.0
    %89 = vmatprep.subr.mxu0 0.0
    %90 = vmatpush1.msra.mxu0 0.0
    %91 = vmatprep.subr.mxu0 0.0
    %92 = vmatpush1.msra.mxu0 0.0
    %93 = vmatprep.subr.mxu0 0.0
    %94 = vmatpush1.msra.mxu0 0.0
    %95 = vmatprep.subr.mxu0 0.0
    %96 = vmatpush1.msra.mxu0 0.0
    %97 = vmatprep.subr.mxu0 0.0
    %98 = vmatpush1.msra.mxu0 0.0
    %99 = vmatprep.subr.mxu0 0.0
    %100 = vmatpush1.msra.mxu0 0.0
    %101 = vmatprep.subr.mxu0 0.0
    %102 = vmatpush1.msra.mxu0 0.0
    %103 = vmatprep.subr.mxu0 0.0
    %104 = vmatpush1.msra.mxu0 0.0
    %105 = vmatprep.subr.mxu0 0.0
    %106 = vmatpush1.msra.mxu0 0.0
    %107 = vmatprep.subr.mxu0 0.0
    %108 = vmatpush1.msra.mxu0 0.0
    %109 = vmatprep.subr.mxu0 0.0
    %110 = vmatpush1.msra.mxu0 0.0
    %111 = vmatprep.subr.mxu0 0.0
    %112 = vmatpush1.msra.mxu0 0.0
    %113 = vmatprep.subr.mxu0 0.0
    %114 = vmatpush1.msra.mxu0 0.0
    %115 = vmatprep.subr.mxu0 0.0
    %116 = vmatpush1.msra.mxu0 0.0
    %117 = vmatprep.subr.mxu0 0.0
    %118 = vmatpush1.msra.mxu0 0.0
    %119 = vmatprep.subr.mxu0 0.0
    %120 = vmatpush1.msra.mxu0 0.0
    %121 = vmatprep.subr.mxu0 0.0
    %122 = vmatpush1.msra.mxu0 0.0
    %123 = vmatprep.mubr.f32.mxu0 0.0
    %124 = vmatmul.mubr.f32.gmra.mrb[0].mxu0 %v53
    %v125 = vpop.f32.mrb[0].mxu0
    %v126 = vadd.f32 0.0, %v125
    %v127 = vpop.f32.mrb[0].mxu0
    %128 = vdwg.mxu0
    %vm129 = vcmask 130048
    %v131 = vsel %vm129, %v46, 0
    %133 = vmatprep.subr.mxu0 0.0
    %134 = vmatpush1.msra.mxu0 %v47
    %135 = vmatprep.subr.mxu0 0.0
    %136 = vmatpush1.msra.mxu0 %v48
    %137 = vmatprep.subr.mxu0 0.0
    %138 = vmatpush1.msra.mxu0 0.0
    %139 = vmatprep.subr.mxu0 0.0
    %140 = vmatpush1.msra.mxu0 0.0
    %141 = vmatprep.subr.mxu0 0.0
    %142 = vmatpush1.msra.mxu0 0.0
    %143 = vmatprep.subr.mxu0 0.0
    %144 = vmatpush1.msra.mxu0 0.0
    %145 = vmatprep.subr.mxu0 0.0
    %146 = vmatpush1.msra.mxu0 0.0
    %147 = vmatprep.subr.mxu0 0.0
    %148 = vmatpush1.msra.mxu0 0.0
    %149 = vmatprep.subr.mxu0 0.0
    %150 = vmatpush1.msra.mxu0 0.0
    %151 = vmatprep.subr.mxu0 0.0
    %152 = vmatpush1.msra.mxu0 0.0
    %153 = vmatprep.subr.mxu0 0.0
    %154 = vmatpush1.msra.mxu0 0.0
    %155 = vmatprep.subr.mxu0 0.0
    %156 = vmatpush1.msra.mxu0 0.0
    %157 = vmatprep.subr.mxu0 0.0
    %158 = vmatpush1.msra.mxu0 0.0
    %159 = vmatprep.subr.mxu0 0.0
    %160 = vmatpush1.msra.mxu0 0.0
    %161 = vmatprep.subr.mxu0 0.0
    %162 = vmatpush1.msra.mxu0 0.0
    %163 = vmatprep.subr.mxu0 0.0
    %164 = vmatpush1.msra.mxu0 0.0
    %165 = vmatprep.subr.mxu0 0.0
    %166 = vmatpush1.msra.mxu0 0.0
    %167 = vmatprep.subr.mxu0 0.0
    %168 = vmatpush1.msra.mxu0 0.0
    %169 = vmatprep.subr.mxu0 0.0
    %170 = vmatpush1.msra.mxu0 0.0
    %171 = vmatprep.subr.mxu0 0.0
    %172 = vmatpush1.msra.mxu0 0.0
    %173 = vmatprep.subr.mxu0 0.0
    %174 = vmatpush1.msra.mxu0 0.0
    %175 = vmatprep.subr.mxu0 0.0
    %176 = vmatpush1.msra.mxu0 0.0
    %177 = vmatprep.subr.mxu0 0.0
    %178 = vmatpush1.msra.mxu0 0.0
    %179 = vmatprep.subr.mxu0 0.0
    %180 = vmatpush1.msra.mxu0 0.0
    %181 = vmatprep.subr.mxu0 0.0
    %182 = vmatpush1.msra.mxu0 0.0
    %183 = vmatprep.subr.mxu0 0.0
    %184 = vmatpush1.msra.mxu0 0.0
    %185 = vmatprep.subr.mxu0 0.0
    %186 = vmatpush1.msra.mxu0 0.0
    %187 = vmatprep.subr.mxu0 0.0
    %188 = vmatpush1.msra.mxu0 0.0
    %189 = vmatprep.subr.mxu0 0.0
    %190 = vmatpush1.msra.mxu0 0.0
    %191 = vmatprep.subr.mxu0 0.0
    %192 = vmatpush1.msra.mxu0 0.0
    %193 = vmatprep.subr.mxu0 0.0
    %194 = vmatpush1.msra.mxu0 0.0
    %195 = vmatprep.subr.mxu0 0.0
    %196 = vmatpush1.msra.mxu0 0.0
    %197 = vmatprep.mubr.f32.mxu0 0.0
    %198 = vmatmul.mubr.f32.gmra.mrb[0].mxu0 %v131
    %v199 = vpop.f32.mrb[0].mxu0
    %v200 = vadd.f32 %v126, %v199
    %v201 = vpop.f32.mrb[0].mxu0
    %202 = vdwg.mxu0
    %v203 = vld [vmem:[%s4] sm:$0x1]
    %v205 = vlaneseq
    %v206 = vshrl.u32 %v205, 7
    %v207 = vsub.s32 0, %v206
    %v208 = vrot.slane %v203, %v207
    %v210 = vadd.f32 %v200, %v208
    %vm211 = vcmp.gt.f32.partialorder %v210, 0.0
    %v212 = vmul.f32 %v210, 0.01
    %v213 = vsel %vm211, %v210, %v212
    %v214 = vld [vmem:[#allocation2] sm:$0xff]
    %v215 = vld [vmem:[#allocation2 + $0x8] sm:$0xff]
    %v216 = vld [vmem:[#allocation2 + $0x10] sm:$0xff]
    %v217 = vld [vmem:[#allocation2 + $0x18] sm:$0xff]
    %v218 = vld [vmem:[#allocation2 + $0x20] sm:$0xff]
    %v219 = vld [vmem:[#allocation2 + $0x28] sm:$0xff]
    %v220 = vld [vmem:[#allocation2 + $0x30] sm:$0xff]
    %v221 = vld [vmem:[#allocation2 + $0x38] sm:$0xff]
    %v222 = vld [vmem:[#allocation2 + $0x40] sm:$0xff]
    %v223 = vld [vmem:[#allocation2 + $0x48] sm:$0xff]
    %v224 = vld [vmem:[#allocation2 + $0x50] sm:$0xff]
    %v225 = vld [vmem:[#allocation2 + $0x58] sm:$0xff]
    %v226 = vld [vmem:[%s6] sm:$0x1]
    %v228 = vlaneseq
    %v229 = vshrl.u32 %v228, 7
    %v230 = vsub.s32 0, %v229
    %v231 = vrot.slane %v226, %v230
    %vm233 = vcmask 785408
    %v235 = vsel %vm233, %v213, 0
    %237 = vmatprep.subr.mxu0 0.0
    %238 = vmatpush1.msra.mxu0 %v214
    %239 = vmatprep.subr.mxu0 0.0
    %240 = vmatpush1.msra.mxu0 %v215
    %241 = vmatprep.subr.mxu0 0.0
    %242 = vmatpush1.msra.mxu0 %v216
    %243 = vmatprep.subr.mxu0 0.0
    %244 = vmatpush1.msra.mxu0 %v217
    %245 = vmatprep.subr.mxu0 0.0
    %246 = vmatpush1.msra.mxu0 %v218
    %247 = vmatprep.subr.mxu0 0.0
    %248 = vmatpush1.msra.mxu0 %v219
    %249 = vmatprep.subr.mxu0 0.0
    %250 = vmatpush1.msra.mxu0 %v220
    %251 = vmatprep.subr.mxu0 0.0
    %252 = vmatpush1.msra.mxu0 %v221
    %253 = vmatprep.subr.mxu0 0.0
    %254 = vmatpush1.msra.mxu0 %v222
    %255 = vmatprep.subr.mxu0 0.0
    %256 = vmatpush1.msra.mxu0 %v223
    %257 = vmatprep.subr.mxu0 0.0
    %258 = vmatpush1.msra.mxu0 %v224
    %259 = vmatprep.subr.mxu0 0.0
    %260 = vmatpush1.msra.mxu0 %v225
    %261 = vmatprep.subr.mxu0 0.0
    %262 = vmatpush1.msra.mxu0 0.0
    %263 = vmatprep.subr.mxu0 0.0
    %264 = vmatpush1.msra.mxu0 0.0
    %265 = vmatprep.subr.mxu0 0.0
    %266 = vmatpush1.msra.mxu0 0.0
    %267 = vmatprep.subr.mxu0 0.0
    %268 = vmatpush1.msra.mxu0 0.0
    %269 = vmatprep.subr.mxu0 0.0
    %270 = vmatpush1.msra.mxu0 0.0
    %271 = vmatprep.subr.mxu0 0.0
    %272 = vmatpush1.msra.mxu0 0.0
    %273 = vmatprep.subr.mxu0 0.0
    %274 = vmatpush1.msra.mxu0 0.0
    %275 = vmatprep.subr.mxu0 0.0
    %276 = vmatpush1.msra.mxu0 0.0
    %277 = vmatprep.subr.mxu0 0.0
    %278 = vmatpush1.msra.mxu0 0.0
    %279 = vmatprep.subr.mxu0 0.0
    %280 = vmatpush1.msra.mxu0 0.0
    %281 = vmatprep.subr.mxu0 0.0
    %282 = vmatpush1.msra.mxu0 0.0
    %283 = vmatprep.subr.mxu0 0.0
    %284 = vmatpush1.msra.mxu0 0.0
    %285 = vmatprep.subr.mxu0 0.0
    %286 = vmatpush1.msra.mxu0 0.0
    %287 = vmatprep.subr.mxu0 0.0
    %288 = vmatpush1.msra.mxu0 0.0
    %289 = vmatprep.subr.mxu0 0.0
    %290 = vmatpush1.msra.mxu0 0.0
    %291 = vmatprep.subr.mxu0 0.0
    %292 = vmatpush1.msra.mxu0 0.0
    %293 = vmatprep.subr.mxu0 0.0
    %294 = vmatpush1.msra.mxu0 0.0
    %295 = vmatprep.subr.mxu0 0.0
    %296 = vmatpush1.msra.mxu0 0.0
    %297 = vmatprep.subr.mxu0 0.0
    %298 = vmatpush1.msra.mxu0 0.0
    %299 = vmatprep.subr.mxu0 0.0
    %300 = vmatpush1.msra.mxu0 0.0
    %301 = vmatprep.mubr.f32.mxu0 0.0
    %302 = vmatmul.mubr.f32.gmra.mrb[0].mxu0 %v235
    %v303 = vpop.f32.mrb[0].mxu0
    %v304 = vadd.f32 %v231, %v303
    %v305 = vpop.f32.mrb[0].mxu0
    %306 = vdwg.mxu0
    %vm307 = vcmp.gt.f32.partialorder %v304, 0.0
    %v308 = vmul.f32 %v304, 0.01
    %v309 = vsel %vm307, %v304, %v308
    %s310 = scalar_lea.vmem [#allocation2], 96
    %v311 = vld [vmem:[%s310] sm:$0xff]
    %v312 = vld [vmem:[%s310 + $0x8] sm:$0xff]
    %v313 = vld [vmem:[%s310 + $0x10] sm:$0xff]
    %v314 = vld [vmem:[%s310 + $0x18] sm:$0xff]
    %v315 = vld [vmem:[%s310 + $0x20] sm:$0xff]
    %v316 = vld [vmem:[%s310 + $0x28] sm:$0xff]
    %v317 = vld [vmem:[%s310 + $0x30] sm:$0xff]
    %v318 = vld [vmem:[%s310 + $0x38] sm:$0xff]
    %v319 = vld [vmem:[%s310 + $0x40] sm:$0xff]
    %v320 = vld [vmem:[%s310 + $0x48] sm:$0xff]
    %v321 = vld [vmem:[%s310 + $0x50] sm:$0xff]
    %v322 = vld [vmem:[%s310 + $0x58] sm:$0xff]
    %s323 = scalar_lea.vmem %s6, 1
    %v324 = vld [vmem:[%s323] sm:$0x1]
    %v326 = vlaneseq
    %v327 = vshrl.u32 %v326, 7
    %v328 = vsub.s32 0, %v327
    %v329 = vrot.slane %v324, %v328
    %v332 = vsel %vm233, %v309, 0
    %334 = vmatprep.subr.mxu0 0.0
    %335 = vmatpush1.msra.mxu0 %v311
    %336 = vmatprep.subr.mxu0 0.0
    %337 = vmatpush1.msra.mxu0 %v312
    %338 = vmatprep.subr.mxu0 0.0
    %339 = vmatpush1.msra.mxu0 %v313
    %340 = vmatprep.subr.mxu0 0.0
    %341 = vmatpush1.msra.mxu0 %v314
    %342 = vmatprep.subr.mxu0 0.0
    %343 = vmatpush1.msra.mxu0 %v315
    %344 = vmatprep.subr.mxu0 0.0
    %345 = vmatpush1.msra.mxu0 %v316
    %346 = vmatprep.subr.mxu0 0.0
    %347 = vmatpush1.msra.mxu0 %v317
    %348 = vmatprep.subr.mxu0 0.0
    %349 = vmatpush1.msra.mxu0 %v318
    %350 = vmatprep.subr.mxu0 0.0
    %351 = vmatpush1.msra.mxu0 %v319
    %352 = vmatprep.subr.mxu0 0.0
    %353 = vmatpush1.msra.mxu0 %v320
    %354 = vmatprep.subr.mxu0 0.0
    %355 = vmatpush1.msra.mxu0 %v321
    %356 = vmatprep.subr.mxu0 0.0
    %357 = vmatpush1.msra.mxu0 %v322
    %358 = vmatprep.subr.mxu0 0.0
    %359 = vmatpush1.msra.mxu0 0.0
    %360 = vmatprep.subr.mxu0 0.0
    %361 = vmatpush1.msra.mxu0 0.0
    %362 = vmatprep.subr.mxu0 0.0
    %363 = vmatpush1.msra.mxu0 0.0
    %364 = vmatprep.subr.mxu0 0.0
    %365 = vmatpush1.msra.mxu0 0.0
    %366 = vmatprep.subr.mxu0 0.0
    %367 = vmatpush1.msra.mxu0 0.0
    %368 = vmatprep.subr.mxu0 0.0
    %369 = vmatpush1.msra.mxu0 0.0
    %370 = vmatprep.subr.mxu0 0.0
    %371 = vmatpush1.msra.mxu0 0.0
    %372 = vmatprep.subr.mxu0 0.0
    %373 = vmatpush1.msra.mxu0 0.0
    %374 = vmatprep.subr.mxu0 0.0
    %375 = vmatpush1.msra.mxu0 0.0
    %376 = vmatprep.subr.mxu0 0.0
    %377 = vmatpush1.msra.mxu0 0.0
    %378 = vmatprep.subr.mxu0 0.0
    %379 = vmatpush1.msra.mxu0 0.0
    %380 = vmatprep.subr.mxu0 0.0
    %381 = vmatpush1.msra.mxu0 0.0
    %382 = vmatprep.subr.mxu0 0.0
    %383 = vmatpush1.msra.mxu0 0.0
    %384 = vmatprep.subr.mxu0 0.0
    %385 = vmatpush1.msra.mxu0 0.0
    %386 = vmatprep.subr.mxu0 0.0
    %387 = vmatpush1.msra.mxu0 0.0
    %388 = vmatprep.subr.mxu0 0.0
    %389 = vmatpush1.msra.mxu0 0.0
    %390 = vmatprep.subr.mxu0 0.0
    %391 = vmatpush1.msra.mxu0 0.0
    %392 = vmatprep.subr.mxu0 0.0
    %393 = vmatpush1.msra.mxu0 0.0
    %394 = vmatprep.subr.mxu0 0.0
    %395 = vmatpush1.msra.mxu0 0.0
    %396 = vmatprep.subr.mxu0 0.0
    %397 = vmatpush1.msra.mxu0 0.0
    %398 = vmatprep.mubr.f32.mxu0 0.0
    %399 = vmatmul.mubr.f32.gmra.mrb[0].mxu0 %v332
    %v400 = vpop.f32.mrb[0].mxu0
    %v401 = vadd.f32 %v329, %v400
    %v402 = vpop.f32.mrb[0].mxu0
    %403 = vdwg.mxu0
    %vm404 = vcmp.gt.f32.partialorder %v401, 0.0
    %v405 = vmul.f32 %v401, 0.01
    %v406 = vsel %vm404, %v401, %v405
    %v407 = vld [vmem:[%s7] sm:$0xff]
    %v408 = vld [vmem:[%s7 + $0x8] sm:$0xff]
    %v409 = vld [vmem:[%s7 + $0x10] sm:$0xff]
    %v410 = vld [vmem:[%s7 + $0x18] sm:$0xff]
    %v411 = vld [vmem:[%s7 + $0x20] sm:$0xff]
    %v412 = vld [vmem:[%s7 + $0x28] sm:$0xff]
    %v413 = vld [vmem:[%s7 + $0x30] sm:$0xff]
    %v414 = vld [vmem:[%s7 + $0x38] sm:$0xff]
    %v415 = vld [vmem:[%s7 + $0x40] sm:$0xff]
    %v416 = vld [vmem:[%s7 + $0x48] sm:$0xff]
    %v417 = vld [vmem:[%s7 + $0x50] sm:$0xff]
    %v418 = vld [vmem:[%s7 + $0x58] sm:$0xff]
    %v419 = vld [vmem:[%s8] sm:$0x1]
    %v421 = vlaneseq
    %v422 = vshrl.u32 %v421, 7
    %v423 = vsub.s32 0, %v422
    %v424 = vrot.slane %v419, %v423
    %v427 = vsel %vm233, %v406, 0
    %429 = vmatprep.subr.mxu0 0.0
    %430 = vmatpush1.msra.mxu0 %v407
    %431 = vmatprep.subr.mxu0 0.0
    %432 = vmatpush1.msra.mxu0 %v408
    %433 = vmatprep.subr.mxu0 0.0
    %434 = vmatpush1.msra.mxu0 %v409
    %435 = vmatprep.subr.mxu0 0.0
    %436 = vmatpush1.msra.mxu0 %v410
    %437 = vmatprep.subr.mxu0 0.0
    %438 = vmatpush1.msra.mxu0 %v411
    %439 = vmatprep.subr.mxu0 0.0
    %440 = vmatpush1.msra.mxu0 %v412
    %441 = vmatprep.subr.mxu0 0.0
    %442 = vmatpush1.msra.mxu0 %v413
    %443 = vmatprep.subr.mxu0 0.0
    %444 = vmatpush1.msra.mxu0 %v414
    %445 = vmatprep.subr.mxu0 0.0
    %446 = vmatpush1.msra.mxu0 %v415
    %447 = vmatprep.subr.mxu0 0.0
    %448 = vmatpush1.msra.mxu0 %v416
    %449 = vmatprep.subr.mxu0 0.0
    %450 = vmatpush1.msra.mxu0 %v417
    %451 = vmatprep.subr.mxu0 0.0
    %452 = vmatpush1.msra.mxu0 %v418
    %453 = vmatprep.subr.mxu0 0.0
    %454 = vmatpush1.msra.mxu0 0.0
    %455 = vmatprep.subr.mxu0 0.0
    %456 = vmatpush1.msra.mxu0 0.0
    %457 = vmatprep.subr.mxu0 0.0
    %458 = vmatpush1.msra.mxu0 0.0
    %459 = vmatprep.subr.mxu0 0.0
    %460 = vmatpush1.msra.mxu0 0.0
    %461 = vmatprep.subr.mxu0 0.0
    %462 = vmatpush1.msra.mxu0 0.0
    %463 = vmatprep.subr.mxu0 0.0
    %464 = vmatpush1.msra.mxu0 0.0
    %465 = vmatprep.subr.mxu0 0.0
    %466 = vmatpush1.msra.mxu0 0.0
    %467 = vmatprep.subr.mxu0 0.0
    %468 = vmatpush1.msra.mxu0 0.0
    %469 = vmatprep.subr.mxu0 0.0
    %470 = vmatpush1.msra.mxu0 0.0
    %471 = vmatprep.subr.mxu0 0.0
    %472 = vmatpush1.msra.mxu0 0.0
    %473 = vmatprep.subr.mxu0 0.0
    %474 = vmatpush1.msra.mxu0 0.0
    %475 = vmatprep.subr.mxu0 0.0
    %476 = vmatpush1.msra.mxu0 0.0
    %477 = vmatprep.subr.mxu0 0.0
    %478 = vmatpush1.msra.mxu0 0.0
    %479 = vmatprep.subr.mxu0 0.0
    %480 = vmatpush1.msra.mxu0 0.0
    %481 = vmatprep.subr.mxu0 0.0
    %482 = vmatpush1.msra.mxu0 0.0
    %483 = vmatprep.subr.mxu0 0.0
    %484 = vmatpush1.msra.mxu0 0.0
    %485 = vmatprep.subr.mxu0 0.0
    %486 = vmatpush1.msra.mxu0 0.0
    %487 = vmatprep.subr.mxu0 0.0
    %488 = vmatpush1.msra.mxu0 0.0
    %489 = vmatprep.subr.mxu0 0.0
    %490 = vmatpush1.msra.mxu0 0.0
    %491 = vmatprep.subr.mxu0 0.0
    %492 = vmatpush1.msra.mxu0 0.0
    %493 = vmatprep.mubr.f32.mxu0 0.0
    %494 = vmatmul.mubr.f32.gmra.mrb[0].mxu0 %v427
    %v495 = vpop.f32.mrb[0].mxu0
    %v496 = vadd.f32 %v424, %v495
    %v497 = vpop.f32.mrb[0].mxu0
    %498 = vdwg.mxu0
    %vm499 = vcmask 23552
    %v500 = vsel %vm499, %v496, 0.0
    %501 = vadd.xlane.f32.xlu0 %v500
    %v502 = vpop.xlane.xlu0 %501
    %vm503 = vcmask 7168
    %504 = vst.msk [vmem:[%s9] sm:$0xff] %vm503, %v502
    // Predicated region
    $region42: #{tpu_custom_call.1} parent=1 // pred_check
      _
    $region43: #{tpu_custom_call.1} parent=1 // pred_check_branch
      %506 = sbr.rel (0) target = $region45
    $region44: #{tpu_custom_call.1} parent=1 // pred_region
      _
    $region45: #{tpu_custom_call.1} parent=1 // pred_fallthru
      _
    // Predicated region
    $region46: #{tpu_custom_call.1} parent=1 // pred_check
      _
    $region47: #{tpu_custom_call.1} parent=1 // pred_check_branch
      %508 = sbr.rel (0) target = $region49
    $region48: #{tpu_custom_call.1} parent=1 // pred_region
      _
    $region49: #{tpu_custom_call.1} parent=1 // pred_fallthru
      _
    %509 = vsyncpa [#allocation3], 1

</llo_original>
